<compile_context>
chip_gen: v5e
topology: v5e:2x2
jax: 0.10.0
libtpu: 0.0.40
codegen_flags: <defaults>
</compile_context>

<pallas_src>
import functools

import jax
import jax.numpy as jnp
import numpy as np
from jax.experimental import pallas as pl
from jax.experimental.pallas import tpu as pltpu

NUM_CLASSES = 8
IGNORE_INDEX = 255
MAX_TILE_HW = 2048           # lanes per spatial tile (upper cap)


def _choose_tile_hw(hw, c_in):
    """Largest lane-dense spatial tile that keeps the x block small in VMEM.

    Budget keeps a double-buffered x block well under the scoped VMEM limit
    on every generation (v7x has only 64 MiB physical VMEM per TC).
    """
    budget_bytes = 4 * 1024 * 1024                      # per x block
    cap = (budget_bytes // (4 * c_in)) // 128 * 128
    cap = max(128, min(MAX_TILE_HW, cap))
    if hw <= cap:
        return hw          # single full-width block (any hw is legal then)
    return cap             # multiple of 128; ragged edge masked in-kernel


def _segcspn_kernel(x_ref, lab_ref, w_ref, b_ref, out_ref, *, hw, num_classes):
    """One (batch, spatial-tile) grid step.

    x_ref   : (C, T)  f32   features, spatial on lanes
    lab_ref : (1, T)  int32 labels
    w_ref   : (NC, C) f32   1x1-conv weight (transposed)
    b_ref   : (NC, 1) f32   bias
    out_ref : (1, 1, 128) f32 per-tile partial sums in lanes 0..3:
              [loss_sum, nll_count, correct_count, valid_pixel_count]
    """
    x = x_ref[...].astype(jnp.float32)          # (C, T)
    w = w_ref[...].astype(jnp.float32)          # (NC, C)
    b = b_ref[...].astype(jnp.float32)          # (NC, 1)
    c_in, t = x.shape

    # 1x1-conv head as NC-wide broadcast FMAs on the VPU (tiny C / NC, so the
    # MXU would be nearly idle); spatial stays lane-dense, classes on sublanes.
    logits = jnp.broadcast_to(b, (num_classes, t)).astype(jnp.float32)
    for c in range(c_in):
        logits = logits + w[:, c:c + 1] * x[c:c + 1, :]   # (NC,1)*(1,T)->(NC,T)

    # log-softmax pieces over the class (sublane) axis, all in f32.
    mx = jnp.max(logits, axis=0, keepdims=True)                       # (1, T)
    z = logits - mx                                                   # (NC, T)
    lse = jnp.log(jnp.sum(jnp.exp(z), axis=0, keepdims=True))         # (1, T)

    lab = lab_ref[...]                                                # (1, T)
    cls = jax.lax.broadcasted_iota(jnp.int32, (num_classes, t), 0)    # (NC, T)
    onehot = cls == lab
    # Target log-prob without materializing the full logp tile.
    tgt_logp = jnp.sum(jnp.where(onehot, z, 0.0), axis=0, keepdims=True) - lse

    # Mask lanes past the true spatial extent (ragged last tile).
    pos = pl.program_id(1) * t + jax.lax.broadcasted_iota(jnp.int32, (1, t), 1)
    in_bounds = pos < hw

    # NLL with ignore_index=255 (numerator / denominator of the mean).
    valid_nll = (lab != IGNORE_INDEX) & in_bounds
    loss_sum = jnp.sum(jnp.where(valid_nll, -tgt_logp, 0.0))
    nll_cnt = jnp.sum(jnp.where(valid_nll, 1.0, 0.0))

    # Pixel accuracy: argmax over classes (first maximal index); the
    # logits == mx comparison stays in f32 (mx is an exact element copy).
    pred = jnp.min(jnp.where(logits == mx, cls, num_classes),
                   axis=0, keepdims=True)                             # (1, T)
    acc_sum = jnp.sum(jnp.where((pred == lab) & in_bounds, 1.0, 0.0))
    pix_sum = jnp.sum(jnp.where((lab >= 0) & in_bounds, 1.0, 0.0))

    lane = jax.lax.broadcasted_iota(jnp.int32, (1, 128), 1)
    tile_out = jnp.where(lane == 0, loss_sum, 0.0)
    tile_out = jnp.where(lane == 1, nll_cnt, tile_out)
    tile_out = jnp.where(lane == 2, acc_sum, tile_out)
    tile_out = jnp.where(lane == 3, pix_sum, tile_out)
    out_ref[0] = tile_out


@jax.jit
def segcspn_forward(data_nchw, labels_nhw, w_t, b):
    """Training-mode forward of Generalized_SEGCSPN (loss + pixel accuracy)."""
    n, c, h, wd = data_nchw.shape
    hw = h * wd

    # Free reshapes only (no transpose, no extra HBM round trip).
    x3d = data_nchw.reshape(n, c, hw)                       # (N, C, HW)
    lab3d = labels_nhw.reshape(n, 1, hw).astype(jnp.int32)  # (N, 1, HW)

    tile_hw = _choose_tile_hw(hw, c)
    grid_t = pl.cdiv(hw, tile_hw)
    grid = (n, grid_t)

    kernel = functools.partial(_segcspn_kernel, hw=hw, num_classes=NUM_CLASSES)

    partials = pl.pallas_call(
        kernel,
        out_shape=jax.ShapeDtypeStruct((n * grid_t, 1, 128), jnp.float32),
        grid_spec=pltpu.PrefetchScalarGridSpec(
            num_scalar_prefetch=0,
            grid=grid,
            in_specs=[
                # features: squeeze batch, classes-on-sublanes comes later
                pl.BlockSpec((None, c, tile_hw), lambda i, j: (i, 0, j)),
                # labels: contiguous lane-dense (1, tile_hw) block
                pl.BlockSpec((None, 1, tile_hw), lambda i, j: (i, 0, j)),
                # tiny head params, same block every step
                pl.BlockSpec((NUM_CLASSES, c), lambda i, j: (0, 0)),
                pl.BlockSpec((NUM_CLASSES, 1), lambda i, j: (0, 0)),
            ],
            # one (1,128) partial-sum block per grid step -> no sequential
            # accumulator, both grid axes can be "parallel"
            out_specs=pl.BlockSpec((1, 1, 128),
                                   lambda i, j: (i * grid_t + j, 0, 0)),
        ),
        compiler_params=pltpu.CompilerParams(
            dimension_semantics=("parallel", "parallel")),
    )(x3d, lab3d, w_t, b)

    p = partials[:, 0, :]                                   # (n*grid_t, 128)
    loss = jnp.sum(p[:, 0]) / jnp.sum(p[:, 1])              # NLL mean (non-ignored)
    acc = jnp.sum(p[:, 2]) / (jnp.sum(p[:, 3]) + 1e-10)     # pixel accuracy
    return {
        "losses": {"loss_semseg": loss[None]},              # unsqueeze(0)
        "metrics": {"accuracy_pixel": acc[None]},           # unsqueeze(0)
    }


def _reference(data_nchw, labels_nhw, w_t, b):
    """Pure-JAX reference for the same computation."""
    n, c, h, wd = data_nchw.shape
    x = data_nchw.reshape(n, c, h * wd)                          # (N, C, P)
    logits = jnp.einsum("kc,ncp->nkp", w_t, x) + b[None, :, :]   # (N, NC, P)
    logits2 = jnp.moveaxis(logits, 1, 2).reshape(-1, NUM_CLASSES)
    lab = labels_nhw.reshape(-1).astype(jnp.int32)
    logp = jax.nn.log_softmax(logits2, axis=1)
    valid = lab != IGNORE_INDEX
    safe = jnp.clip(lab, 0, NUM_CLASSES - 1)
    picked = jnp.take_along_axis(logp, safe[:, None], axis=1)[:, 0]
    loss = jnp.sum(jnp.where(valid, -picked, 0.0)) / jnp.sum(valid)
    preds = jnp.argmax(logits2, axis=1)
    acc = jnp.sum(preds == lab) / (jnp.sum(lab >= 0) + 1e-10)
    return loss, acc


if __name__ == "__main__":
    key = jax.random.PRNGKey(0)
    k_data, k_lab, k_ign, k_w, k_b = jax.random.split(key, 5)

    N, C, H, W = 2, 4, 16, 16
    data = jax.random.normal(k_data, (N, C, H, W), dtype=jnp.float32)

    labels = jax.random.randint(k_lab, (N, H, W), 0, NUM_CLASSES, dtype=jnp.int32)
    ignore_mask = jax.random.uniform(k_ign, (N, H, W)) < 0.1
    labels = jnp.where(ignore_mask, IGNORE_INDEX, labels)

    # Deterministic "kaiming_normal_" init for the 1x1 conv head.
    # Weight is stored transposed: (NUM_CLASSES, C); bias as (NUM_CLASSES, 1).
    fan_in = C
    w_t = jax.random.normal(k_w, (NUM_CLASSES, C), dtype=jnp.float32) * np.sqrt(2.0 / fan_in)
    bound = 1.0 / np.sqrt(fan_in)
    b = jax.random.uniform(k_b, (NUM_CLASSES, 1), minval=-bound, maxval=bound,
                           dtype=jnp.float32)

    out = segcspn_forward(data, labels, w_t, b)
    jax.block_until_ready(out)

    ref_loss, ref_acc = _reference(data, labels, w_t, b)
    np.testing.assert_allclose(np.asarray(out["losses"]["loss_semseg"])[0],
                               np.asarray(ref_loss), rtol=1e-4, atol=1e-5)
    np.testing.assert_allclose(np.asarray(out["metrics"]["accuracy_pixel"])[0],
                               np.asarray(ref_acc), rtol=1e-4, atol=1e-5)

    print("KERNEL_OK")
</pallas_src>

<mosaic_0001>
module attributes {stable_mosaic.version = 11 : i64} {
  func.func @_segcspn_kernel(%arg0: i32, %arg1: i32, %arg2: memref<1x4x256xf32, #tpu.memory_space<vmem>>, %arg3: memref<1x1x256xi32, #tpu.memory_space<vmem>>, %arg4: memref<8x4xf32, #tpu.memory_space<vmem>>, %arg5: memref<8x1xf32, #tpu.memory_space<vmem>>, %arg6: memref<1x1x128xf32, #tpu.memory_space<vmem>>) attributes {dimension_semantics = [#tpu.dimension_semantics<parallel>, #tpu.dimension_semantics<parallel>], iteration_bounds = array<i64: 2, 1>, scalar_prefetch = 0 : i64, scratch_operands = 0 : i64, tpu.core_type = #tpu.core_type<tc>, window_params = [{transform_indices = @transform_0, window_bounds = array<i64: 1, 4, 256>}, {transform_indices = @transform_1, window_bounds = array<i64: 1, 1, 256>}, {pipeline_mode = #tpu.pipeline_mode<synchronous>, transform_indices = @transform_2, window_bounds = array<i64: 8, 4>}, {pipeline_mode = #tpu.pipeline_mode<synchronous>, transform_indices = @transform_3, window_bounds = array<i64: 8, 1>}, {transform_indices = @transform_4, window_bounds = array<i64: 1, 1, 128>}]} {
    %c0 = arith.constant 0 : index
    %c0_0 = arith.constant 0 : index
    %c0_1 = arith.constant 0 : index
    %0 = vector.load %arg2[%c0, %c0_0, %c0_1] : memref<1x4x256xf32, #tpu.memory_space<vmem>>, vector<1x4x256xf32>
    %1 = vector.shape_cast %0 : vector<1x4x256xf32> to vector<4x256xf32>
    %c0_2 = arith.constant 0 : index
    %c0_3 = arith.constant 0 : index
    %2 = vector.load %arg4[%c0_2, %c0_3] : memref<8x4xf32, #tpu.memory_space<vmem>>, vector<8x4xf32>
    %c0_4 = arith.constant 0 : index
    %c0_5 = arith.constant 0 : index
    %3 = vector.load %arg5[%c0_4, %c0_5] : memref<8x1xf32, #tpu.memory_space<vmem>>, vector<8x1xf32>
    %4 = vector.shape_cast %3 : vector<8x1xf32> to vector<8x1xf32>
    %5 = vector.broadcast %4 : vector<8x1xf32> to vector<8x256xf32>
    %6 = vector.extract_strided_slice %2 {offsets = [0, 0], sizes = [8, 1], strides = [1, 1]} : vector<8x4xf32> to vector<8x1xf32>
    %7 = vector.extract_strided_slice %1 {offsets = [0, 0], sizes = [1, 256], strides = [1, 1]} : vector<4x256xf32> to vector<1x256xf32>
    %8 = vector.broadcast %6 : vector<8x1xf32> to vector<8x256xf32>
    %9 = vector.broadcast %7 : vector<1x256xf32> to vector<8x256xf32>
    %10 = arith.mulf %8, %9 : vector<8x256xf32>
    %11 = arith.addf %5, %10 : vector<8x256xf32>
    %12 = vector.extract_strided_slice %2 {offsets = [0, 1], sizes = [8, 1], strides = [1, 1]} : vector<8x4xf32> to vector<8x1xf32>
    %13 = vector.extract_strided_slice %1 {offsets = [1, 0], sizes = [1, 256], strides = [1, 1]} : vector<4x256xf32> to vector<1x256xf32>
    %14 = vector.broadcast %12 : vector<8x1xf32> to vector<8x256xf32>
    %15 = vector.broadcast %13 : vector<1x256xf32> to vector<8x256xf32>
    %16 = arith.mulf %14, %15 : vector<8x256xf32>
    %17 = arith.addf %11, %16 : vector<8x256xf32>
    %18 = vector.extract_strided_slice %2 {offsets = [0, 2], sizes = [8, 1], strides = [1, 1]} : vector<8x4xf32> to vector<8x1xf32>
    %19 = vector.extract_strided_slice %1 {offsets = [2, 0], sizes = [1, 256], strides = [1, 1]} : vector<4x256xf32> to vector<1x256xf32>
    %20 = vector.broadcast %18 : vector<8x1xf32> to vector<8x256xf32>
    %21 = vector.broadcast %19 : vector<1x256xf32> to vector<8x256xf32>
    %22 = arith.mulf %20, %21 : vector<8x256xf32>
    %23 = arith.addf %17, %22 : vector<8x256xf32>
    %24 = vector.extract_strided_slice %2 {offsets = [0, 3], sizes = [8, 1], strides = [1, 1]} : vector<8x4xf32> to vector<8x1xf32>
    %25 = vector.extract_strided_slice %1 {offsets = [3, 0], sizes = [1, 256], strides = [1, 1]} : vector<4x256xf32> to vector<1x256xf32>
    %26 = vector.broadcast %24 : vector<8x1xf32> to vector<8x256xf32>
    %27 = vector.broadcast %25 : vector<1x256xf32> to vector<8x256xf32>
    %28 = arith.mulf %26, %27 : vector<8x256xf32>
    %29 = arith.addf %23, %28 : vector<8x256xf32>
    %cst = arith.constant dense<0xFF800000> : vector<256xf32>
    %30 = vector.multi_reduction <maximumf>, %29, %cst [0] : vector<8x256xf32> to vector<256xf32>
    %31 = vector.shape_cast %30 : vector<256xf32> to vector<1x256xf32>
    %32 = vector.broadcast %31 : vector<1x256xf32> to vector<8x256xf32>
    %33 = arith.subf %29, %32 : vector<8x256xf32>
    %34 = math.exp %33 : vector<8x256xf32>
    %cst_6 = arith.constant dense<0.000000e+00> : vector<256xf32>
    %35 = vector.multi_reduction <add>, %34, %cst_6 [0] : vector<8x256xf32> to vector<256xf32>
    %36 = vector.shape_cast %35 : vector<256xf32> to vector<1x256xf32>
    %37 = math.log %36 : vector<1x256xf32>
    %c0_7 = arith.constant 0 : index
    %c0_8 = arith.constant 0 : index
    %c0_9 = arith.constant 0 : index
    %38 = vector.load %arg3[%c0_7, %c0_8, %c0_9] : memref<1x1x256xi32, #tpu.memory_space<vmem>>, vector<1x1x256xi32>
    %39 = vector.shape_cast %38 : vector<1x1x256xi32> to vector<1x256xi32>
    %40 = tpu.iota {dimensions = array<i32: 0>} : vector<8x256xi32>
    %41 = vector.broadcast %39 : vector<1x256xi32> to vector<8x256xi32>
    %42 = arith.cmpi eq, %40, %41 : vector<8x256xi32>
    %cst_10 = arith.constant 0.000000e+00 : f32
    %43 = vector.broadcast %cst_10 : f32 to vector<8x256xf32>
    %44 = arith.select %42, %33, %43 : vector<8x256xi1>, vector<8x256xf32>
    %cst_11 = arith.constant dense<0.000000e+00> : vector<256xf32>
    %45 = vector.multi_reduction <add>, %44, %cst_11 [0] : vector<8x256xf32> to vector<256xf32>
    %46 = vector.shape_cast %45 : vector<256xf32> to vector<1x256xf32>
    %47 = arith.subf %46, %37 : vector<1x256xf32>
    %c256_i32 = arith.constant 256 : i32
    %48 = arith.muli %arg1, %c256_i32 : i32
    %49 = tpu.iota {dimensions = array<i32: 1>} : vector<1x256xi32>
    %50 = vector.broadcast %48 : i32 to vector<1x256xi32>
    %51 = arith.addi %50, %49 : vector<1x256xi32>
    %c256_i32_12 = arith.constant 256 : i32
    %52 = vector.broadcast %c256_i32_12 : i32 to vector<1x256xi32>
    %53 = arith.cmpi slt, %51, %52 : vector<1x256xi32>
    %c255_i32 = arith.constant 255 : i32
    %54 = vector.broadcast %c255_i32 : i32 to vector<1x256xi32>
    %55 = arith.cmpi ne, %39, %54 : vector<1x256xi32>
    %56 = arith.andi %55, %53 : vector<1x256xi1>
    %cst_13 = arith.constant 0.000000e+00 : f32
    %57 = vector.broadcast %cst_13 : f32 to vector<1x256xf32>
    %58 = arith.subf %57, %47 : vector<1x256xf32>
    %cst_14 = arith.constant 0.000000e+00 : f32
    %59 = vector.broadcast %cst_14 : f32 to vector<1x256xf32>
    %60 = arith.select %56, %58, %59 : vector<1x256xi1>, vector<1x256xf32>
    %61 = vector.shape_cast %60 : vector<1x256xf32> to vector<1x1x256xf32>
    %cst_15 = arith.constant dense<0.000000e+00> : vector<1xf32>
    %62 = vector.multi_reduction <add>, %61, %cst_15 [1, 2] : vector<1x1x256xf32> to vector<1xf32>
    %63 = vector.shape_cast %62 : vector<1xf32> to vector<1x1x1xf32>
    %64 = vector.extract %63[0, 0, 0] : f32 from vector<1x1x1xf32>
    %cst_16 = arith.constant 1.000000e+00 : f32
    %cst_17 = arith.constant 0.000000e+00 : f32
    %65 = vector.broadcast %cst_16 : f32 to vector<1x256xf32>
    %66 = vector.broadcast %cst_17 : f32 to vector<1x256xf32>
    %67 = arith.select %56, %65, %66 : vector<1x256xi1>, vector<1x256xf32>
    %68 = vector.shape_cast %67 : vector<1x256xf32> to vector<1x1x256xf32>
    %cst_18 = arith.constant dense<0.000000e+00> : vector<1xf32>
    %69 = vector.multi_reduction <add>, %68, %cst_18 [1, 2] : vector<1x1x256xf32> to vector<1xf32>
    %70 = vector.shape_cast %69 : vector<1xf32> to vector<1x1x1xf32>
    %71 = vector.extract %70[0, 0, 0] : f32 from vector<1x1x1xf32>
    %72 = vector.broadcast %31 : vector<1x256xf32> to vector<8x256xf32>
    %73 = arith.cmpf oeq, %29, %72 : vector<8x256xf32>
    %c8_i32 = arith.constant 8 : i32
    %74 = vector.broadcast %c8_i32 : i32 to vector<8x256xi32>
    %75 = arith.select %73, %40, %74 : vector<8x256xi1>, vector<8x256xi32>
    %cst_19 = arith.constant dense<2147483647> : vector<256xi32>
    %76 = vector.multi_reduction <minsi>, %75, %cst_19 [0] : vector<8x256xi32> to vector<256xi32>
    %77 = vector.shape_cast %76 : vector<256xi32> to vector<1x256xi32>
    %78 = arith.cmpi eq, %77, %39 : vector<1x256xi32>
    %79 = arith.andi %78, %53 : vector<1x256xi1>
    %cst_20 = arith.constant 1.000000e+00 : f32
    %cst_21 = arith.constant 0.000000e+00 : f32
    %80 = vector.broadcast %cst_20 : f32 to vector<1x256xf32>
    %81 = vector.broadcast %cst_21 : f32 to vector<1x256xf32>
    %82 = arith.select %79, %80, %81 : vector<1x256xi1>, vector<1x256xf32>
    %83 = vector.shape_cast %82 : vector<1x256xf32> to vector<1x1x256xf32>
    %cst_22 = arith.constant dense<0.000000e+00> : vector<1xf32>
    %84 = vector.multi_reduction <add>, %83, %cst_22 [1, 2] : vector<1x1x256xf32> to vector<1xf32>
    %85 = vector.shape_cast %84 : vector<1xf32> to vector<1x1x1xf32>
    %86 = vector.extract %85[0, 0, 0] : f32 from vector<1x1x1xf32>
    %c0_i32 = arith.constant 0 : i32
    %87 = vector.broadcast %c0_i32 : i32 to vector<1x256xi32>
    %88 = arith.cmpi sge, %39, %87 : vector<1x256xi32>
    %89 = arith.andi %88, %53 : vector<1x256xi1>
    %cst_23 = arith.constant 1.000000e+00 : f32
    %cst_24 = arith.constant 0.000000e+00 : f32
    %90 = vector.broadcast %cst_23 : f32 to vector<1x256xf32>
    %91 = vector.broadcast %cst_24 : f32 to vector<1x256xf32>
    %92 = arith.select %89, %90, %91 : vector<1x256xi1>, vector<1x256xf32>
    %93 = vector.shape_cast %92 : vector<1x256xf32> to vector<1x1x256xf32>
    %cst_25 = arith.constant dense<0.000000e+00> : vector<1xf32>
    %94 = vector.multi_reduction <add>, %93, %cst_25 [1, 2] : vector<1x1x256xf32> to vector<1xf32>
    %95 = vector.shape_cast %94 : vector<1xf32> to vector<1x1x1xf32>
    %96 = vector.extract %95[0, 0, 0] : f32 from vector<1x1x1xf32>
    %97 = tpu.iota {dimensions = array<i32: 1>} : vector<1x128xi32>
    %c0_i32_26 = arith.constant 0 : i32
    %98 = vector.broadcast %c0_i32_26 : i32 to vector<1x128xi32>
    %99 = arith.cmpi eq, %97, %98 : vector<1x128xi32>
    %cst_27 = arith.constant 0.000000e+00 : f32
    %100 = vector.broadcast %64 : f32 to vector<1x128xf32>
    %101 = vector.broadcast %cst_27 : f32 to vector<1x128xf32>
    %102 = arith.select %99, %100, %101 : vector<1x128xi1>, vector<1x128xf32>
    %c1_i32 = arith.constant 1 : i32
    %103 = vector.broadcast %c1_i32 : i32 to vector<1x128xi32>
    %104 = arith.cmpi eq, %97, %103 : vector<1x128xi32>
    %105 = vector.broadcast %71 : f32 to vector<1x128xf32>
    %106 = arith.select %104, %105, %102 : vector<1x128xi1>, vector<1x128xf32>
    %c2_i32 = arith.constant 2 : i32
    %107 = vector.broadcast %c2_i32 : i32 to vector<1x128xi32>
    %108 = arith.cmpi eq, %97, %107 : vector<1x128xi32>
    %109 = vector.broadcast %86 : f32 to vector<1x128xf32>
    %110 = arith.select %108, %109, %106 : vector<1x128xi1>, vector<1x128xf32>
    %c3_i32 = arith.constant 3 : i32
    %111 = vector.broadcast %c3_i32 : i32 to vector<1x128xi32>
    %112 = arith.cmpi eq, %97, %111 : vector<1x128xi32>
    %113 = vector.broadcast %96 : f32 to vector<1x128xf32>
    %114 = arith.select %112, %113, %110 : vector<1x128xi1>, vector<1x128xf32>
    %c0_28 = arith.constant 0 : index
    %c0_29 = arith.constant 0 : index
    %c0_30 = arith.constant 0 : index
    %115 = vector.load %arg6[%c0_28, %c0_29, %c0_30] : memref<1x1x128xf32, #tpu.memory_space<vmem>>, vector<1x1x128xf32>
    %116 = vector.shape_cast %115 : vector<1x1x128xf32> to vector<1x128xf32>
    %117 = vector.shape_cast %114 : vector<1x128xf32> to vector<1x1x128xf32>
    tpu.vector_store %arg6[%c0_28, %c0_29, %c0_30], %117 {strides = array<i32>} : memref<1x1x128xf32, #tpu.memory_space<vmem>>, vector<1x1x128xf32>,
    return
  }
  func.func @transform_0(%arg0: i32, %arg1: i32) -> (i32, i32, i32) {
    %c0_i32 = arith.constant 0 : i32
    %c0_i32_0 = arith.constant 0 : i32
    return %arg0, %c0_i32, %arg1 : i32, i32, i32
  }
  func.func @transform_1(%arg0: i32, %arg1: i32) -> (i32, i32, i32) {
    %c0_i32 = arith.constant 0 : i32
    %c0_i32_0 = arith.constant 0 : i32
    return %arg0, %c0_i32, %arg1 : i32, i32, i32
  }
  func.func @transform_2(%arg0: i32, %arg1: i32) -> (i32, i32) {
    %c0_i32 = arith.constant 0 : i32
    %c0_i32_0 = arith.constant 0 : i32
    %c0_i32_1 = arith.constant 0 : i32
    return %c0_i32, %c0_i32_0 : i32, i32
  }
  func.func @transform_3(%arg0: i32, %arg1: i32) -> (i32, i32) {
    %c0_i32 = arith.constant 0 : i32
    %c0_i32_0 = arith.constant 0 : i32
    %c0_i32_1 = arith.constant 0 : i32
    return %c0_i32, %c0_i32_0 : i32, i32
  }
  func.func @transform_4(%arg0: i32, %arg1: i32) -> (i32, i32, i32) {
    %c1_i32 = arith.constant 1 : i32
    %0 = arith.muli %arg0, %c1_i32 : i32
    %1 = arith.addi %0, %arg1 : i32
    %c0_i32 = arith.constant 0 : i32
    %c0_i32_0 = arith.constant 0 : i32
    %c0_i32_1 = arith.constant 0 : i32
    return %1, %c0_i32, %c0_i32_0 : i32, i32, i32
  }
}

</mosaic_0001>

<llo_original>
// kernel: segcspn_forward.1
$region0: #{segcspn_forward.1}
  #allocation0 [shape = 'u32[]', space=smem, size = 0x4, offset = 0x4, fixed_abs, tag = 'smem constant byte address 0x4 - core index']
  #allocation1 [shape = 'u32[72,128]{1,0:T(1,128)}', space=vmem, size = 0x9000, scoped, tag = 'internal scratch']
  %s0 = inlined_call_operand.vmem [shape: f32[2,4,256], index: 0, kind: input, shape index: {}]
  %s1 = inlined_call_operand.vmem [shape: s32[2,1,256], index: 1, kind: input, shape index: {}]
  %s2 = inlined_call_operand.vmem [shape: f32[8,4], index: 2, kind: input, shape index: {}]
  %s3 = inlined_call_operand.vmem [shape: f32[8,1], index: 3, kind: input, shape index: {}]
  %s4 = inlined_call_operand.vmem [shape: f32[2,1,128], index: 4, kind: output, shape index: {}]
  %s5 = sld [smem:[#allocation0]]
  $region49: #{segcspn_forward.1} parent=0
    _
  %s7 = ssub.s32 1, %s5
  %s8 = scalar_select 0, %s7, %s5
  loop: start=0, step=1, limit=4
  $region2: #{segcspn_forward.1} parent=0 // loop_pre_header
    _
  $region3: #{segcspn_forward.1} parent=0 // loop_header
    %s10 = sphi 0, %s14
    %p11 = scmp.ge.s32.totalorder %s10, 4
    %s17 = sphi 0, %s29
    %s18 = sphi 0, %s25
    %s19 = sphi 0, %s17
    %s20 = sphi 0, %s18
    %s21 = sphi 0, %s19
    %s22 = sphi 0, %s20
    %s34 = sphi 0, %s36
    %s37 = sphi 0, %s34
    %s38 = sphi 0, %s37
    %s54 = sphi 0, %s38
    %s62 = sphi 0, %s64
    %s65 = sphi 0, %s62
    %s66 = sphi 0, %s65
    %s82 = sphi 0, %s66
    %s86 = sphi 0, %s86
    %s88 = sphi 0, %s86
    %s89 = sphi 0, %s88
    %s103 = sphi 0, %s89
    %s107 = sphi 0, %s107
    %s109 = sphi 0, %s107
    %s110 = sphi 0, %s109
    %s124 = sphi 0, %s110
    %s132 = sphi 0, %s134
    %s135 = sphi 0, %s132
    %s136 = sphi 0, %s135
    %s152 = sphi 0, %s136
  $region4: #{segcspn_forward.1} parent=0 // loop_header_branch
    %13 = sbr.rel (%p11) target = $region8
  $region5: #{segcspn_forward.1} parent=0 // loop_body
    %s15 = ssub.s32 %s10, 1
    %s16 = ssub.s32 %s10, 2
    %s23 = sadd.s32 1, %s18
    %p24 = scmp.ge.s32.totalorder %s23, 1
    %s25 = scalar_select %p24, 0, %s23
    %s26 = sadd.s32 1, %s17
    %s27 = scalar_select %p24, %s26, %s17
    %p28 = scmp.ge.s32.totalorder %s27, 2
    %s29 = scalar_select %p28, 0, %s27
    %s30 = ssub.s32 %s17, %s29
    %s31 = ssub.s32 %s18, %s25
    %s32 = sor.u32 %s30, %s31
    %p33 = scmp.eq.s32.totalorder %s32, 0
    %s35 = sadd.s32 %s34, 1
    %s36 = scalar_select %p33, %s34, %s35
    %p39 = pneg %p33
    %p40 = scmp.eq.s32.totalorder %s10, 1
    %p41 = por %p39, %p40
    %p42 = scmp.ne.s32.totalorder %s34, %s37
    %p43 = scmp.eq.s32.totalorder %s10, 0
    %p44 = por %p42, %p43
    %p45 = scmp.ne.s32.totalorder %s34, %s37
    %p46 = scmp.eq.s32.totalorder %s15, 1
    %p47 = por %p45, %p46
    %p48 = scmp.ne.s32.totalorder %s37, %s38
    %p49 = scmp.eq.s32.totalorder %s15, 0
    %p50 = por %p48, %p49
    %p51 = scmp.ne.s32.totalorder %s37, %s38
    %p52 = scmp.eq.s32.totalorder %s16, 1
    %p53 = por %p51, %p52
    %p55 = scmp.ne.s32.totalorder %s38, %s54
    %p56 = scmp.eq.s32.totalorder %s16, 0
    %p57 = por %p55, %p56
    %s58 = ssub.s32 %s17, %s29
    %s59 = ssub.s32 %s18, %s25
    %s60 = sor.u32 %s58, %s59
    %p61 = scmp.eq.s32.totalorder %s60, 0
    %s63 = sadd.s32 %s62, 1
    %s64 = scalar_select %p61, %s62, %s63
    %p67 = pneg %p61
    %p68 = scmp.eq.s32.totalorder %s10, 1
    %p69 = por %p67, %p68
    %p70 = scmp.ne.s32.totalorder %s62, %s65
    %p71 = scmp.eq.s32.totalorder %s10, 0
    %p72 = por %p70, %p71
    %p73 = scmp.ne.s32.totalorder %s62, %s65
    %p74 = scmp.eq.s32.totalorder %s15, 1
    %p75 = por %p73, %p74
    %p76 = scmp.ne.s32.totalorder %s65, %s66
    %p77 = scmp.eq.s32.totalorder %s15, 0
    %p78 = por %p76, %p77
    %p79 = scmp.ne.s32.totalorder %s65, %s66
    %p80 = scmp.eq.s32.totalorder %s16, 1
    %p81 = por %p79, %p80
    %p83 = scmp.ne.s32.totalorder %s66, %s82
    %p84 = scmp.eq.s32.totalorder %s16, 0
    %p85 = por %p83, %p84
    %s87 = sadd.s32 %s86, 1
    %p90 = scmp.eq.s32.totalorder %s10, 1
    %p91 = scmp.ne.s32.totalorder %s86, %s88
    %p92 = scmp.eq.s32.totalorder %s10, 0
    %p93 = por %p91, %p92
    %p94 = scmp.ne.s32.totalorder %s86, %s88
    %p95 = scmp.eq.s32.totalorder %s15, 1
    %p96 = por %p94, %p95
    %p97 = scmp.ne.s32.totalorder %s88, %s89
    %p98 = scmp.eq.s32.totalorder %s15, 0
    %p99 = por %p97, %p98
    %p100 = scmp.ne.s32.totalorder %s88, %s89
    %p101 = scmp.eq.s32.totalorder %s16, 1
    %p102 = por %p100, %p101
    %p104 = scmp.ne.s32.totalorder %s89, %s103
    %p105 = scmp.eq.s32.totalorder %s16, 0
    %p106 = por %p104, %p105
    %s108 = sadd.s32 %s107, 1
    %p111 = scmp.eq.s32.totalorder %s10, 1
    %p112 = scmp.ne.s32.totalorder %s107, %s109
    %p113 = scmp.eq.s32.totalorder %s10, 0
    %p114 = por %p112, %p113
    %p115 = scmp.ne.s32.totalorder %s107, %s109
    %p116 = scmp.eq.s32.totalorder %s15, 1
    %p117 = por %p115, %p116
    %p118 = scmp.ne.s32.totalorder %s109, %s110
    %p119 = scmp.eq.s32.totalorder %s15, 0
    %p120 = por %p118, %p119
    %p121 = scmp.ne.s32.totalorder %s109, %s110
    %p122 = scmp.eq.s32.totalorder %s16, 1
    %p123 = por %p121, %p122
    %p125 = scmp.ne.s32.totalorder %s110, %s124
    %p126 = scmp.eq.s32.totalorder %s16, 0
    %p127 = por %p125, %p126
    %s128 = sadd.s32 %s17, %s18
    %s129 = sadd.s32 %s29, %s25
    %s130 = ssub.s32 %s128, %s129
    %p131 = scmp.eq.s32.totalorder %s130, 0
    %s133 = sadd.s32 %s132, 1
    %s134 = scalar_select %p131, %s132, %s133
    %p137 = pneg %p131
    %p138 = scmp.eq.s32.totalorder %s10, 1
    %p139 = por %p137, %p138
    %p140 = scmp.ne.s32.totalorder %s132, %s135
    %p141 = scmp.eq.s32.totalorder %s10, 0
    %p142 = por %p140, %p141
    %p143 = scmp.ne.s32.totalorder %s132, %s135
    %p144 = scmp.eq.s32.totalorder %s15, 1
    %p145 = por %p143, %p144
    %p146 = scmp.ne.s32.totalorder %s135, %s136
    %p147 = scmp.eq.s32.totalorder %s15, 0
    %p148 = por %p146, %p147
    %p149 = scmp.ne.s32.totalorder %s135, %s136
    %p150 = scmp.eq.s32.totalorder %s16, 1
    %p151 = por %p149, %p150
    %p153 = scmp.ne.s32.totalorder %s136, %s152
    %p154 = scmp.eq.s32.totalorder %s16, 0
    %p155 = por %p153, %p154
    %p156 = scmp.le.s32.totalorder 1, %s10
    %p157 = scmp.lt.s32.totalorder %s10, 3
    %p158 = pnand %p156, %p157
    %p159 = pneg %p158
    // Predicated region
    $region9: #{segcspn_forward.1} parent=5 // pred_check
      _
    $region10: #{segcspn_forward.1} parent=5 // pred_check_branch
      %161 = sbr.rel (%p158) target = $region12
    $region11: #{segcspn_forward.1} parent=5 // pred_region
      %s162 = ssub.s32 %s10, 1
      // Predicated region
      $region13: #{segcspn_forward.1} parent=11 // pred_check
        %p163 = pneg %p99
      $region14: #{segcspn_forward.1} parent=11 // pred_check_branch
        %165 = sbr.rel (%p163) target = $region16
      $region15: #{segcspn_forward.1} parent=11 // pred_region
        _
      $region16: #{segcspn_forward.1} parent=11 // pred_fallthru
        _
      // Predicated region
      $region17: #{segcspn_forward.1} parent=11 // pred_check
        %p166 = pneg %p120
      $region18: #{segcspn_forward.1} parent=11 // pred_check_branch
        %168 = sbr.rel (%p166) target = $region20
      $region19: #{segcspn_forward.1} parent=11 // pred_region
        _
      $region20: #{segcspn_forward.1} parent=11 // pred_fallthru
        _
    $region12: #{segcspn_forward.1} parent=5 // pred_fallthru
      _
    %p169 = scmp.lt.s32.totalorder %s10, 2
    // Predicated region
    $region21: #{segcspn_forward.1} parent=5 // pred_check
      %p170 = pneg %p169
    $region22: #{segcspn_forward.1} parent=5 // pred_check_branch
      %172 = sbr.rel (%p170) target = $region24
    $region23: #{segcspn_forward.1} parent=5 // pred_region
      // Predicated region
      $region25: #{segcspn_forward.1} parent=23 // pred_check
        %p173 = pneg %p44
      $region26: #{segcspn_forward.1} parent=23 // pred_check_branch
        %175 = sbr.rel (%p173) target = $region28
      $region27: #{segcspn_forward.1} parent=23 // pred_region
        %s176 = smul.u32 2, %s18
        %p177 = scmp.lt.s32.totalorder %s17, 1
        %s178 = scalar_select %p177, %s17, 1
        %p179 = scmp.lt.s32.totalorder %s176, 1
        %s180 = scalar_select %p179, %s176, 1
        %s181 = smul.addr %s178, 2
        %s182 = sadd.s32 %s180, %s181
        %s183 = smul.addr %s182, 4
        %s184 = scalar_lea.vmem %s0, %s183
        %s185 = smul.u32 2, %s18
      $region28: #{segcspn_forward.1} parent=23 // pred_fallthru
        _
      // Predicated region
      $region29: #{segcspn_forward.1} parent=23 // pred_check
        %p186 = pneg %p72
      $region30: #{segcspn_forward.1} parent=23 // pred_check_branch
        %188 = sbr.rel (%p186) target = $region32
      $region31: #{segcspn_forward.1} parent=23 // pred_region
        %s189 = smul.u32 2, %s18
        %p190 = scmp.lt.s32.totalorder %s17, 1
        %s191 = scalar_select %p190, %s17, 1
        %p192 = scmp.lt.s32.totalorder %s189, 1
        %s193 = scalar_select %p192, %s189, 1
        %s194 = smul.addr %s191, 2
        %s195 = sadd.s32 %s193, %s194
        %s196 = scalar_lea.vmem %s1, %s195
        %s197 = smul.u32 2, %s18
      $region32: #{segcspn_forward.1} parent=23 // pred_fallthru
        _
    $region24: #{segcspn_forward.1} parent=5 // pred_fallthru
      _
    %p198 = scmp.le.s32.totalorder 1, %s10
    %p199 = scmp.lt.s32.totalorder %s10, 3
    %p200 = pnand %p198, %p199
    %p201 = pneg %p200
    // Predicated region
    $region33: #{segcspn_forward.1} parent=5 // pred_check
      _
    $region34: #{segcspn_forward.1} parent=5 // pred_check_branch
      %203 = sbr.rel (%p200) target = $region36
    $region35: #{segcspn_forward.1} parent=5 // pred_region
      %s204 = ssub.s32 %s10, 1
      %s205 = smul.u32 2, %s20
      %p206 = scmp.lt.s32.totalorder %s19, 1
      %s207 = scalar_select %p206, %s19, 1
      %p208 = scmp.lt.s32.totalorder %s205, 1
      %s209 = scalar_select %p208, %s205, 1
      %s210 = smul.addr %s207, 2
      %s211 = sadd.s32 %s209, %s210
      %s212 = smul.addr %s211, 4
      %s213 = scalar_lea.vmem %s0, %s212
      %p214 = pneg %p50
      %p215 = pneg %p47
      %s216 = smul.u32 2, %s20
      %p217 = scmp.lt.s32.totalorder %s19, 1
      %s218 = scalar_select %p217, %s19, 1
      %p219 = scmp.lt.s32.totalorder %s216, 1
      %s220 = scalar_select %p219, %s216, 1
      %s221 = smul.addr %s218, 2
      %s222 = sadd.s32 %s220, %s221
      %s223 = scalar_lea.vmem %s1, %s222
      %p224 = pneg %p78
      %p225 = pneg %p75
      %p226 = pneg %p99
      %p227 = pneg %p96
      %p228 = pneg %p120
      %p229 = pneg %p117
      %p230 = pneg %p148
      %p231 = pneg %p145
      %s232 = sadd.s32 %s19, %s20
      %p233 = scmp.lt.s32.totalorder %s232, 1
      %s234 = scalar_select %p233, %s232, 1
      %s235 = scalar_lea.vmem %s4, %s234
      %s236 = smul.u32 2, %s20
      %p237 = scmp.lt.s32.totalorder %s19, 1
      %s238 = scalar_select %p237, %s19, 1
      %p239 = scmp.lt.s32.totalorder %s236, 1
      %s240 = scalar_select %p239, %s236, 1
      %s241 = smul.addr %s238, 2
      %s242 = sadd.s32 %s240, %s241
      %s243 = smul.addr %s242, 4
      %s244 = scalar_lea.vmem %s0, %s243
      %s245 = smul.u32 2, %s20
      %s246 = smul.u32 2, %s20
      %p247 = scmp.lt.s32.totalorder %s19, 1
      %s248 = scalar_select %p247, %s19, 1
      %p249 = scmp.lt.s32.totalorder %s246, 1
      %s250 = scalar_select %p249, %s246, 1
      %s251 = smul.addr %s248, 2
      %s252 = sadd.s32 %s250, %s251
      %s253 = scalar_lea.vmem %s1, %s252
      %s254 = smul.u32 2, %s20
      %s255 = sadd.s32 %s19, %s20
      %p256 = scmp.lt.s32.totalorder %s255, 1
      %s257 = scalar_select %p256, %s255, 1
      %s258 = scalar_lea.vmem %s4, %s257
      %s259 = sadd.s32 %s19, %s20
      %v260 = vld [vmem:[%s244] sm:$0xff]
      %v261 = vld [vmem:[%s2] sm:$0xff]
      %v262 = vld [vmem:[%s3] sm:$0xff]
      %264 = vset.pattern.permute.xlu0 0
      %265 = vperm.xlu0 %264, %v262
      %v266 = vpop.permute.xlu0 %265
      %269 = vset.pattern.permute.xlu0 0
      %270 = vperm.xlu0 %269, %v261
      %v271 = vpop.permute.xlu0 %270
      %v274 = vperm.slane %v260, 0
      %v275 = vperm.slane %v260, 4
      %v278 = vperm.slane %v274, 0
      %v279 = vperm.slane %v275, 0
      %v280 = vmul.f32 %v271, %v278
      %v281 = vmul.f32 %v271, %v279
      %v282 = vadd.f32 %v266, %v280
      %v283 = vadd.f32 %v266, %v281
      %284 = vset.pattern.permute.xlu0 1
      %285 = vperm.xlu0 %284, %v261
      %v286 = vpop.permute.xlu0 %285
      %v288 = vperm.slane %v260, 1
      %v289 = vperm.slane %v260, 5
      %v292 = vperm.slane %v288, 1
      %v293 = vperm.slane %v289, 1
      %v294 = vmul.f32 %v286, %v292
      %v295 = vmul.f32 %v286, %v293
      %v296 = vadd.f32 %v282, %v294
      %v297 = vadd.f32 %v283, %v295
      %298 = vset.pattern.permute.xlu0 2
      %299 = vperm.xlu0 %298, %v261
      %v300 = vpop.permute.xlu0 %299
      %v302 = vperm.slane %v260, 2
      %v303 = vperm.slane %v260, 6
      %v306 = vperm.slane %v302, 2
      %v307 = vperm.slane %v303, 2
      %v308 = vmul.f32 %v300, %v306
      %v309 = vmul.f32 %v300, %v307
      %v310 = vadd.f32 %v296, %v308
      %v311 = vadd.f32 %v297, %v309
      %312 = vset.pattern.permute.xlu0 3
      %313 = vperm.xlu0 %312, %v261
      %v314 = vpop.permute.xlu0 %313
      %v316 = vperm.slane %v260, 3
      %v317 = vperm.slane %v260, 7
      %v320 = vperm.slane %v316, 3
      %v321 = vperm.slane %v317, 3
      %v322 = vmul.f32 %v314, %v320
      %v323 = vmul.f32 %v314, %v321
      %v324 = vadd.f32 %v310, %v322
      %v325 = vadd.f32 %v311, %v323
      %v326 = vrot.slane %v324, 4
      %v327 = vmax.f32 %v324, %v326
      %v328 = vrot.slane %v327, 2
      %v329 = vmax.f32 %v327, %v328
      %v330 = vrot.slane %v329, 1
      %v331 = vmax.f32 %v329, %v330
      %v332 = vrot.slane %v325, 4
      %v333 = vmax.f32 %v325, %v332
      %v334 = vrot.slane %v333, 2
      %v335 = vmax.f32 %v333, %v334
      %v336 = vrot.slane %v335, 1
      %v337 = vmax.f32 %v335, %v336
      %v338 = vsub.f32 %v324, %v331
      %v339 = vsub.f32 %v325, %v337
      %v340 = vmul.f32 %v338, 1.442695
      %v341 = vpow.pop %v340
      %v342 = vmul.f32 %v339, 1.442695
      %v343 = vpow.pop %v342
      %v344 = vrot.slane %v341, 4
      %v345 = vadd.f32 %v341, %v344
      %v346 = vrot.slane %v345, 2
      %v347 = vadd.f32 %v345, %v346
      %v348 = vrot.slane %v347, 1
      %v349 = vadd.f32 %v347, %v348
      %v350 = vrot.slane %v343, 4
      %v351 = vadd.f32 %v343, %v350
      %v352 = vrot.slane %v351, 2
      %v353 = vadd.f32 %v351, %v352
      %v354 = vrot.slane %v353, 1
      %v355 = vadd.f32 %v353, %v354
      %v356 = vlog2.pop %v349
      %v357 = vmul.f32 %v356, 0.6931472
      %v358 = vlog2.pop %v355
      %v359 = vmul.f32 %v358, 0.6931472
      %v360 = vld [vmem:[%s253] sm:$0x3]
      %v361 = vlaneseq
      %v362 = vshrl.u32 %v361, 7
      %v363 = vperm.slane %v360, 0
      %v364 = vperm.slane %v360, 1
      %vm365 = vcmp.eq.s32.totalorder %v362, %v363
      %vm366 = vcmp.eq.s32.totalorder %v362, %v364
      %v367 = vsel %vm365, %v338, 0.0
      %v368 = vsel %vm366, %v339, 0.0
      %v369 = vrot.slane %v367, 4
      %v370 = vadd.f32 %v367, %v369
      %v371 = vrot.slane %v370, 2
      %v372 = vadd.f32 %v370, %v371
      %v373 = vrot.slane %v372, 1
      %v374 = vadd.f32 %v372, %v373
      %v375 = vrot.slane %v368, 4
      %v376 = vadd.f32 %v368, %v375
      %v377 = vrot.slane %v376, 2
      %v378 = vadd.f32 %v376, %v377
      %v379 = vrot.slane %v378, 1
      %v380 = vadd.f32 %v378, %v379
      %v381 = vsub.f32 %v374, %v357
      %v382 = vsub.f32 %v380, %v359
      %s383 = smul.u32 %s20, 256
      %v384 = vlaneseq
      %v385 = vand.u32 %v384, 127
      %v386 = vadd.s32 %v385, 128
      %v387 = vstv %s383
      %v388 = vadd.s32 %v387, %v385
      %v389 = vadd.s32 %v387, %v386
      %vm390 = vcmp.lt.s32.totalorder %v388, 256
      %vm391 = vcmp.lt.s32.totalorder %v389, 256
      %vm392 = vcmp.ne.s32.totalorder %v360, 255
      %v393 = vsel %vm390, 1, 0
      %v394 = vsel %vm391, 1, 0
      %v395 = vrot.slane %v394, 7
      %vm396 = vcmask 1040384
      %v397 = vsel %vm396, %v393, %v395
      %vm398 = vcmp.ne.s32.totalorder %v397, 0
      %vm399 = vmand %vm392, %vm398
      %v400 = vsub.f32 0.0, %v381
      %v401 = vsub.f32 0.0, %v382
      %v404 = vrot.slane %v401, 7
      %v405 = vsel %vm396, %v400, %v404
      %v407 = vsel %vm399, %v405, 0.0
      %v409 = vperm.slane %v407, 0
      %v410 = vperm.slane %v407, 1
      %v413 = vsel %vm396, %v409, 0.0
      %v414 = vsel %vm396, %v410, 0.0
      %v415 = vadd.f32 %v413, %v414
      %416 = vadd.xlane.f32.xlu0 %v415
      %v417 = vpop.xlane.xlu0 %416
      %v418 = vrot.slane %v417, 4
      %v419 = vadd.f32 %v417, %v418
      %v420 = vrot.slane %v419, 2
      %v421 = vadd.f32 %v419, %v420
      %v422 = vrot.slane %v421, 1
      %v423 = vadd.f32 %v421, %v422
      %s424 = vtos %v423
      %v425 = vsel %vm399, 1.0, 0.0
      %v427 = vperm.slane %v425, 0
      %v428 = vperm.slane %v425, 1
      %v431 = vsel %vm396, %v427, 0.0
      %v432 = vsel %vm396, %v428, 0.0
      %v433 = vadd.f32 %v431, %v432
      %434 = vadd.xlane.f32.xlu0 %v433
      %v435 = vpop.xlane.xlu0 %434
      %v436 = vrot.slane %v435, 4
      %v437 = vadd.f32 %v435, %v436
      %v438 = vrot.slane %v437, 2
      %v439 = vadd.f32 %v437, %v438
      %v440 = vrot.slane %v439, 1
      %v441 = vadd.f32 %v439, %v440
      %s442 = vtos %v441
      %vm443 = vcmp.eq.f32.partialorder %v324, %v331
      %vm444 = vcmp.eq.f32.partialorder %v325, %v337
      %v445 = vsel %vm443, %v362, 8
      %v446 = vsel %vm444, %v362, 8
      %v447 = vrot.slane %v445, 4
      %vm448 = vcmp.lt.s32.totalorder %v445, %v447
      %v449 = vsel %vm448, %v445, %v447
      %v450 = vrot.slane %v449, 2
      %vm451 = vcmp.lt.s32.totalorder %v449, %v450
      %v452 = vsel %vm451, %v449, %v450
      %v453 = vrot.slane %v452, 1
      %vm454 = vcmp.lt.s32.totalorder %v452, %v453
      %v455 = vsel %vm454, %v452, %v453
      %v456 = vrot.slane %v446, 4
      %vm457 = vcmp.lt.s32.totalorder %v446, %v456
      %v458 = vsel %vm457, %v446, %v456
      %v459 = vrot.slane %v458, 2
      %vm460 = vcmp.lt.s32.totalorder %v458, %v459
      %v461 = vsel %vm460, %v458, %v459
      %v462 = vrot.slane %v461, 1
      %vm463 = vcmp.lt.s32.totalorder %v461, %v462
      %v464 = vsel %vm463, %v461, %v462
      %vm465 = vcmp.eq.s32.totalorder %v455, %v363
      %vm466 = vcmp.eq.s32.totalorder %v464, %v364
      %vm467 = vmand %vm465, %vm390
      %vm468 = vmand %vm466, %vm391
      %v469 = vsel %vm467, 1.0, 0.0
      %v470 = vsel %vm468, 1.0, 0.0
      %v471 = vsel %vm396, %v469, 0.0
      %v472 = vsel %vm396, %v470, 0.0
      %v473 = vadd.f32 %v471, %v472
      %474 = vadd.xlane.f32.xlu0 %v473
      %v475 = vpop.xlane.xlu0 %474
      %v476 = vrot.slane %v475, 4
      %v477 = vadd.f32 %v475, %v476
      %v478 = vrot.slane %v477, 2
      %v479 = vadd.f32 %v477, %v478
      %v480 = vrot.slane %v479, 1
      %v481 = vadd.f32 %v479, %v480
      %s482 = vtos %v481
      %vm483 = vcmp.ge.s32.totalorder %v360, 0
      %vm484 = vmand %vm483, %vm398
      %v485 = vsel %vm484, 1.0, 0.0
      %v487 = vperm.slane %v485, 0
      %v488 = vperm.slane %v485, 1
      %v491 = vsel %vm396, %v487, 0.0
      %v492 = vsel %vm396, %v488, 0.0
      %v493 = vadd.f32 %v491, %v492
      %494 = vadd.xlane.f32.xlu0 %v493
      %v495 = vpop.xlane.xlu0 %494
      %v496 = vrot.slane %v495, 4
      %v497 = vadd.f32 %v495, %v496
      %v498 = vrot.slane %v497, 2
      %v499 = vadd.f32 %v497, %v498
      %v500 = vrot.slane %v499, 1
      %v501 = vadd.f32 %v499, %v500
      %s502 = vtos %v501
      %vm503 = vcmp.eq.s32.totalorder %v385, 0
      %v504 = vstv %s424
      %v505 = vsel %vm503, %v504, 0.0
      %vm506 = vcmp.eq.s32.totalorder %v385, 1
      %v507 = vstv %s442
      %v508 = vsel %vm506, %v507, %v505
      %vm509 = vcmp.eq.s32.totalorder %v385, 2
      %v510 = vstv %s482
      %v511 = vsel %vm509, %v510, %v508
      %vm512 = vcmp.eq.s32.totalorder %v385, 3
      %v513 = vstv %s502
      %v514 = vsel %vm512, %v513, %v511
      %515 = vst [vmem:[%s258] sm:$0x1] %v514
      %s516 = sadd.s32 %s19, %s20
      %p517 = scmp.lt.s32.totalorder %s516, 1
      %s518 = scalar_select %p517, %s516, 1
      %s519 = scalar_lea.vmem %s4, %s518
      // Predicated region
      $region37: #{segcspn_forward.1} parent=35 // pred_check
        %p520 = pneg %p145
      $region38: #{segcspn_forward.1} parent=35 // pred_check_branch
        %522 = sbr.rel (%p520) target = $region40
      $region39: #{segcspn_forward.1} parent=35 // pred_region
        %s523 = sadd.s32 %s19, %s20
      $region40: #{segcspn_forward.1} parent=35 // pred_fallthru
        _
    $region36: #{segcspn_forward.1} parent=5 // pred_fallthru
      _
    %p524 = scmp.le.s32.totalorder 2, %s10
    // Predicated region
    $region41: #{segcspn_forward.1} parent=5 // pred_check
      %p525 = pneg %p524
    $region42: #{segcspn_forward.1} parent=5 // pred_check_branch
      %527 = sbr.rel (%p525) target = $region44
    $region43: #{segcspn_forward.1} parent=5 // pred_region
      %s528 = ssub.s32 %s10, 2
      // Predicated region
      $region45: #{segcspn_forward.1} parent=43 // pred_check
        %p529 = pneg %p151
      $region46: #{segcspn_forward.1} parent=43 // pred_check_branch
        %531 = sbr.rel (%p529) target = $region48
      $region47: #{segcspn_forward.1} parent=43 // pred_region
        %s532 = sadd.s32 %s21, %s22
        %p533 = scmp.lt.s32.totalorder %s532, 1
        %s534 = scalar_select %p533, %s532, 1
        %s535 = scalar_lea.vmem %s4, %s534
      $region48: #{segcspn_forward.1} parent=43 // pred_fallthru
        _
    $region44: #{segcspn_forward.1} parent=5 // pred_fallthru
      _
  $region6: #{segcspn_forward.1} parent=0 // loop_footer
    %s14 = sadd.s32 1, %s10
  $region7: #{segcspn_forward.1} parent=0 // loop_footer_branch
    %9 = sbr.rel target = $region3
  $region8: #{segcspn_forward.1} parent=0 // loop_exit
    _

</llo_original>
